<compile_context>
chip_gen: v7x
topology: tpu7x:2x2x1
jax: 0.10.0
libtpu: 0.0.40
codegen_flags: <defaults>
</compile_context>

<pallas_src>
import functools

import jax
import jax.numpy as jnp
from jax import lax
from jax.experimental import pallas as pl
from jax.experimental.pallas import tpu as pltpu


_VMEM_BUDGET = 40 * 1024 * 1024  # conservative working-set budget (v7x: 64 MiB/TC)


def _round_up(x: int, m: int) -> int:
    return (x + m - 1) // m * m


def _as_float(x) -> float:
    if isinstance(x, (int, float)):
        return float(x)
    return float(jnp.asarray(x).reshape(-1)[0])


def _vmem_estimate(tile: int, d_pad: int, op_bytes: int) -> int:
    # double-buffered q + k input blocks, resident normalized-q scratch,
    # plus (tile, 1) f32 accumulators / output padded to 128 lanes.
    return 5 * tile * d_pad * op_bytes + 4 * tile * 128 * 4


def _choose_tile(n: int, min_step: int, max_tile: int) -> int:
    """Row-tile size: a multiple of the sublane packing tile (min_step), preferring
    MXU-friendly 256/128 multiples and >= 2 row tiles (v7x megacore sharding), and
    never a full-extent fallback that could blow the VMEM budget for large N."""
    cap = min(max_tile, max(min_step, (n // 2) // min_step * min_step))
    if n <= cap or n < 2 * min_step:
        return _round_up(n, min_step)            # single (possibly padded) tile
    divisors = [t for t in range(min_step, cap + 1, min_step) if n % t == 0]
    for align in (256, 128, min_step):
        aligned = [t for t in divisors if t % align == 0]
        if aligned:
            return max(aligned)                  # exact divisor: no N padding needed
    return min(cap, 128)                         # no divisor: pad N up to a multiple


def _nt_xent_kernel(zq_ref, zk_ref, out_ref, qn_scr, l_scr, pos_scr, *,
                    inv_temp, half_b, n_valid, tile_m, tile_n, num_col_tiles,
                    padded_cols):
    i = pl.program_id(0)      # q row-tile index ("parallel": shards across TCs)
    k = pl.program_id(1)      # column tile index ("arbitrary": reduction axis)

    @pl.when(k == 0)
    def _init():
        # z rows arrive pre-L2-normalized; fold 1/temperature into the resident
        # q tile once per row tile (f32 scale, cast back to the MXU operand dtype).
        qn_scr[...] = (zq_ref[...].astype(jnp.float32) * inv_temp).astype(qn_scr.dtype)
        l_scr[...] = jnp.zeros_like(l_scr)
        pos_scr[...] = jnp.zeros_like(pos_scr)

    # (tile_m, tile_n) tile of sim[i, j] = cos(z_i, z_j) / temperature.
    # Native-dtype MXU operands, f32 accumulate.
    s = lax.dot_general(qn_scr[...], zk_ref[...], (((1,), (1,)), ((), ())),
                        preferred_element_type=jnp.float32)

    # Fixed-shift softmax: |s| <= inv_temp, so exp(s - inv_temp) <= ~1 and no
    # running max / per-step rescale is needed.
    p = jnp.exp(s - inv_temp)
    l_scr[...] += jnp.sum(p, axis=1, keepdims=True)

    row0 = i * tile_m          # first global q-row index of this tile
    col0 = k * tile_n          # first global column (j) index of this tile

    def _global_ij():
        gi = row0 + lax.broadcasted_iota(jnp.int32, (tile_m, 1), 0)
        gj = col0 + lax.broadcasted_iota(jnp.int32, (1, tile_n), 1)
        return gi, gj

    # Self-similarity (j == i) must not enter the logsumexp: only the ~1 column
    # tile per row tile that crosses the diagonal pays the mask + extra reduce.
    @pl.when(jnp.logical_and(col0 < row0 + tile_m, row0 < col0 + tile_n))
    def _drop_diag():
        gi, gj = _global_ij()
        l_scr[...] -= jnp.sum(jnp.where(gi == gj, p, 0.0), axis=1, keepdims=True)

    # Zero-padded columns (j >= n_valid) also must not enter the logsumexp: only
    # the last column tile pays.  Statically removed when N needed no padding.
    if padded_cols:
        @pl.when(k == num_col_tiles - 1)
        def _drop_pad():
            _, gj = _global_ij()
            l_scr[...] -= jnp.sum(jnp.where(gj >= n_valid, p, 0.0),
                                  axis=1, keepdims=True)

    # Positive pair j == i +- half_b: only tiles crossing that band pay.
    # (Matches against padded columns contribute an exact 0 and are harmless.)
    hits_upper = jnp.logical_and(col0 < row0 + half_b + tile_m,
                                 row0 + half_b < col0 + tile_n)
    hits_lower = jnp.logical_and(col0 < row0 - half_b + tile_m,
                                 row0 - half_b < col0 + tile_n)

    @pl.when(jnp.logical_or(hits_upper, hits_lower))
    def _grab_positive():
        gi, gj = _global_ij()
        mask = jnp.logical_or(gj == gi + half_b, gj == gi - half_b)
        pos_scr[...] += jnp.sum(jnp.where(mask, s, 0.0), axis=1, keepdims=True)

    @pl.when(k == num_col_tiles - 1)
    def _finalize():
        # Cross-entropy with label 0 == logsumexp_{j != i} sim[i, j] - positive.
        out_ref[...] = inv_temp + jnp.log(l_scr[...]) - pos_scr[...]


def compare_loss2(inputs, strong_inputs, targets=None, temperature=0.5,
                  block_rows=None, mxu_dtype=None, max_tile=512):
    """NT-Xent loss.  inputs / strong_inputs: (B, D).  targets unused (as in PyTorch).
    `temperature` is baked in statically; `mxu_dtype` optionally downcasts the
    normalized operands fed to the MXU (e.g. jnp.bfloat16)."""
    del targets  # unused, exactly as in the PyTorch forward
    temperature = _as_float(temperature)
    inv_temp = 1.0 / temperature
    if 2.0 * inv_temp > 80.0:
        # With shift = 1/T, exp(s - 1/T) could underflow for every j when all
        # cosines are ~-1 -> log(0).  Guard the fixed-shift path statically.
        # TODO(synk): add an online-running-max logsumexp variant for T < ~0.025.
        raise NotImplementedError("temperature too small for fixed-shift logsumexp")

    z = jnp.concatenate([strong_inputs, inputs], axis=0)         # (N, D)
    n, d = z.shape
    half_b = inputs.shape[0]
    assert n == 2 * half_b

    op_dtype = jnp.dtype(mxu_dtype) if mxu_dtype is not None else jnp.dtype(z.dtype)
    op_bytes = op_dtype.itemsize

    # L2-normalize once in f32 (hoisted out of the N x N tile loop), clamping each
    # row norm at 1e-8 (PyTorch clamps the norm *product* at 1e-8; differs only for
    # near-zero embeddings).  Store in the MXU operand dtype.
    zf = z.astype(jnp.float32)
    sq = jnp.sum(zf * zf, axis=1, keepdims=True)
    zn = (zf * lax.rsqrt(jnp.maximum(sq, 1e-16))).astype(op_dtype)

    # Pad D to a lane-aligned multiple of 128 so the MXU contraction is full-width
    # even for small projection heads (zero columns do not change dot products).
    d_pad = max(128, _round_up(d, 128))
    if d_pad != d:
        zn = jnp.pad(zn, ((0, 0), (0, d_pad - d)))

    # Dtype-aware row tile (sublane packing: 8 for f32, 16 for bf16, 32 for int8),
    # capped so the working set stays inside the VMEM budget (v7x: 64 MiB/TC).
    min_step = {4: 8, 2: 16, 1: 32}.get(op_bytes, 8)
    eff_max = max(min_step, _round_up(max_tile, min_step))
    while eff_max > min_step and _vmem_estimate(eff_max, d_pad, op_bytes) > _VMEM_BUDGET:
        eff_max -= min_step
    tile = int(block_rows) if block_rows is not None else _choose_tile(n, min_step, eff_max)

    # Pad N up to a multiple of the tile; padded (zero) columns are removed from
    # the logsumexp in-kernel, padded rows are sliced off before the reduction.
    n_pad = _round_up(n, tile)
    if n_pad != n:
        zn = jnp.pad(zn, ((0, n_pad - n), (0, 0)))
    num_tiles = n_pad // tile

    est = _vmem_estimate(tile, d_pad, op_bytes)
    vmem_limit = int(min(60 << 20, max(32 << 20, 2 * est)))   # v5e default is 16 MiB

    kernel = functools.partial(
        _nt_xent_kernel,
        inv_temp=inv_temp, half_b=half_b, n_valid=n,
        tile_m=tile, tile_n=tile, num_col_tiles=num_tiles,
        padded_cols=(n_pad != n))

    per_row = pl.pallas_call(
        kernel,
        out_shape=jax.ShapeDtypeStruct((n_pad, 1), jnp.float32),
        grid_spec=pltpu.PrefetchScalarGridSpec(
            num_scalar_prefetch=0,
            grid=(num_tiles, num_tiles),
            in_specs=[
                pl.BlockSpec((tile, d_pad), lambda i, k: (i, 0)),   # q row tile
                pl.BlockSpec((tile, d_pad), lambda i, k: (k, 0)),   # k column tile
            ],
            out_specs=pl.BlockSpec((tile, 1), lambda i, k: (i, 0)),
            scratch_shapes=[
                pltpu.VMEM((tile, d_pad), op_dtype),   # normalized q * (1/T), resident
                pltpu.VMEM((tile, 1), jnp.float32),    # sum of exp(sim - 1/T), j != i
                pltpu.VMEM((tile, 1), jnp.float32),    # positive logit
            ],
        ),
        compiler_params=pltpu.CompilerParams(
            dimension_semantics=("parallel", "arbitrary"),
            vmem_limit_bytes=vmem_limit),
    )(zn, zn)

    # CE mean over the N valid rows, then the module's extra `loss /= N`.
    return jnp.sum(per_row[:n, 0]) / float(n * n)


def _reference_loss(inputs, strong_inputs, temperature=0.5):
    """Pure-JAX reference mirroring the PyTorch module."""
    z = jnp.concatenate([strong_inputs, inputs], axis=0).astype(jnp.float32)
    n, b = z.shape[0], inputs.shape[0]
    norms = jnp.linalg.norm(z, axis=1)
    denom = jnp.maximum(norms[:, None] * norms[None, :], 1e-8)
    sim = (z @ z.T) / denom / temperature
    idx = jnp.arange(n)
    pair = jnp.where(idx < b, idx + b, idx - b)
    pos = sim[idx, pair]
    sim_no_diag = jnp.where(jnp.eye(n, dtype=bool), -jnp.inf, sim)
    lse = jax.scipy.special.logsumexp(sim_no_diag, axis=1)
    return jnp.mean(lse - pos) / n


if __name__ == "__main__":
    key = jax.random.PRNGKey(0)
    k1, k2, k3 = jax.random.split(key, 3)

    B, D = 8, 32  # small demo shapes: batch=8 per view, hidden=32 -> N = 16
    inputs = jax.random.normal(k1, (B, D), dtype=jnp.float32)
    strong_inputs = jax.random.normal(k2, (B, D), dtype=jnp.float32)
    targets = jax.random.randint(k3, (B,), 0, 10)  # unused, kept for API fidelity

    # Test 1: f32, forced 8-row tiles -> 2x2 grid; exercises the pl.when-gated
    # diagonal / positive-band branches and the accumulator init/finalize.
    loss = jax.block_until_ready(
        compare_loss2(inputs, strong_inputs, targets, temperature=0.5, block_rows=8))
    ref = _reference_loss(inputs, strong_inputs, temperature=0.5)
    assert jnp.allclose(loss, ref, atol=1e-5, rtol=1e-5), (loss, ref)

    # Test 2: N = 12 does not divide the 8-row tile -> exercises N padding and the
    # in-kernel zero-padded-column correction.
    loss2 = jax.block_until_ready(
        compare_loss2(inputs[:6], strong_inputs[:6], None, temperature=0.5,
                      block_rows=8))
    ref2 = _reference_loss(inputs[:6], strong_inputs[:6], temperature=0.5)
    assert jnp.allclose(loss2, ref2, atol=1e-5, rtol=1e-5), (loss2, ref2)

    # Test 3: bf16 MXU operands (normalization still f32), looser tolerance.
    loss3 = jax.block_until_ready(
        compare_loss2(inputs, strong_inputs, targets, temperature=0.5,
                      mxu_dtype=jnp.bfloat16))
    assert jnp.allclose(loss3, ref, atol=5e-3, rtol=5e-2), (loss3, ref)

    print("KERNEL_OK")
</pallas_src>

<mosaic_0001>
module attributes {stable_mosaic.version = 11 : i64} {
  func.func @_nt_xent_kernel(%arg0: i32, %arg1: i32, %arg2: memref<8x128xf32, #tpu.memory_space<vmem>>, %arg3: memref<8x128xf32, #tpu.memory_space<vmem>>, %arg4: memref<8x1xf32, #tpu.memory_space<vmem>>, %arg5: memref<8x128xf32, #tpu.memory_space<vmem>>, %arg6: memref<8x1xf32, #tpu.memory_space<vmem>>, %arg7: memref<8x1xf32, #tpu.memory_space<vmem>>) attributes {dimension_semantics = [#tpu.dimension_semantics<parallel>, #tpu.dimension_semantics<arbitrary>], iteration_bounds = array<i64: 2, 2>, scalar_prefetch = 0 : i64, scratch_operands = 3 : i64, tpu.core_type = #tpu.core_type<tc>, window_params = [{transform_indices = @transform_0, window_bounds = array<i64: 8, 128>}, {transform_indices = @transform_1, window_bounds = array<i64: 8, 128>}, {transform_indices = @transform_2, window_bounds = array<i64: 8, 1>}]} {
    %c0_i32 = arith.constant 0 : i32
    %0 = arith.cmpi eq, %arg1, %c0_i32 : i32
    %1 = arith.extui %0 : i1 to i32
    %c0_i32_0 = arith.constant 0 : i32
    %2 = arith.cmpi ne, %1, %c0_i32_0 : i32
    scf.if %2 {
      %c0_24 = arith.constant 0 : index
      %c0_25 = arith.constant 0 : index
      %43 = vector.load %arg2[%c0_24, %c0_25] : memref<8x128xf32, #tpu.memory_space<vmem>>, vector<8x128xf32>
      %cst_26 = arith.constant 2.000000e+00 : f32
      %44 = vector.broadcast %cst_26 : f32 to vector<8x128xf32>
      %45 = arith.mulf %43, %44 : vector<8x128xf32>
      %c0_27 = arith.constant 0 : index
      %c0_28 = arith.constant 0 : index
      %46 = vector.load %arg5[%c0_27, %c0_28] : memref<8x128xf32, #tpu.memory_space<vmem>>, vector<8x128xf32>
      tpu.vector_store %arg5[%c0_27, %c0_28], %45 {strides = array<i32>} : memref<8x128xf32, #tpu.memory_space<vmem>>, vector<8x128xf32>,
      %cst_29 = arith.constant 0.000000e+00 : f32
      %47 = vector.broadcast %cst_29 : f32 to vector<8x1xf32>
      %c0_30 = arith.constant 0 : index
      %c0_31 = arith.constant 0 : index
      %48 = vector.load %arg6[%c0_30, %c0_31] : memref<8x1xf32, #tpu.memory_space<vmem>>, vector<8x1xf32>
      tpu.vector_store %arg6[%c0_30, %c0_31], %47 {strides = array<i32>} : memref<8x1xf32, #tpu.memory_space<vmem>>, vector<8x1xf32>,
      %cst_32 = arith.constant 0.000000e+00 : f32
      %49 = vector.broadcast %cst_32 : f32 to vector<8x1xf32>
      %c0_33 = arith.constant 0 : index
      %c0_34 = arith.constant 0 : index
      %50 = vector.load %arg7[%c0_33, %c0_34] : memref<8x1xf32, #tpu.memory_space<vmem>>, vector<8x1xf32>
      tpu.vector_store %arg7[%c0_33, %c0_34], %49 {strides = array<i32>} : memref<8x1xf32, #tpu.memory_space<vmem>>, vector<8x1xf32>,
    } else {
    }
    %c0 = arith.constant 0 : index
    %c0_1 = arith.constant 0 : index
    %3 = vector.load %arg5[%c0, %c0_1] : memref<8x128xf32, #tpu.memory_space<vmem>>, vector<8x128xf32>
    %c0_2 = arith.constant 0 : index
    %c0_3 = arith.constant 0 : index
    %4 = vector.load %arg3[%c0_2, %c0_3] : memref<8x128xf32, #tpu.memory_space<vmem>>, vector<8x128xf32>
    %cst = arith.constant dense<0.000000e+00> : vector<8x8xf32>
    %5 = tpu.matmul %3, %4, %cst {dimension_numbers = #tpu.dot_dimension_numbers<[1], [1], [0], [0], [0, 0, 1, 0], [], []>} : vector<8x128xf32>, vector<8x128xf32>, vector<8x8xf32> -> vector<8x8xf32>
    %cst_4 = arith.constant 2.000000e+00 : f32
    %6 = vector.broadcast %cst_4 : f32 to vector<8x8xf32>
    %7 = arith.subf %5, %6 : vector<8x8xf32>
    %8 = math.exp %7 : vector<8x8xf32>
    %c0_5 = arith.constant 0 : index
    %c0_6 = arith.constant 0 : index
    %9 = vector.load %arg6[%c0_5, %c0_6] : memref<8x1xf32, #tpu.memory_space<vmem>>, vector<8x1xf32>
    %cst_7 = arith.constant dense<0.000000e+00> : vector<8xf32>
    %10 = vector.multi_reduction <add>, %8, %cst_7 [1] : vector<8x8xf32> to vector<8xf32>
    %11 = vector.shape_cast %10 : vector<8xf32> to vector<8x1xf32>
    %12 = arith.addf %9, %11 : vector<8x1xf32>
    %c0_8 = arith.constant 0 : index
    %c0_9 = arith.constant 0 : index
    %13 = vector.load %arg6[%c0_8, %c0_9] : memref<8x1xf32, #tpu.memory_space<vmem>>, vector<8x1xf32>
    tpu.vector_store %arg6[%c0_8, %c0_9], %12 {strides = array<i32>} : memref<8x1xf32, #tpu.memory_space<vmem>>, vector<8x1xf32>,
    %c8_i32 = arith.constant 8 : i32
    %14 = arith.muli %arg0, %c8_i32 : i32
    %c8_i32_10 = arith.constant 8 : i32
    %15 = arith.muli %arg1, %c8_i32_10 : i32
    %c8_i32_11 = arith.constant 8 : i32
    %16 = arith.addi %14, %c8_i32_11 : i32
    %17 = arith.cmpi slt, %15, %16 : i32
    %c8_i32_12 = arith.constant 8 : i32
    %18 = arith.addi %15, %c8_i32_12 : i32
    %19 = arith.cmpi slt, %14, %18 : i32
    %20 = arith.andi %17, %19 : i1
    %21 = arith.extui %20 : i1 to i32
    %c0_i32_13 = arith.constant 0 : i32
    %22 = arith.cmpi ne, %21, %c0_i32_13 : i32
    scf.if %22 {
      %43 = tpu.iota {dimensions = array<i32: 0>} : vector<8x1xi32>
      %44 = vector.broadcast %14 : i32 to vector<8x1xi32>
      %45 = arith.addi %44, %43 : vector<8x1xi32>
      %46 = tpu.iota {dimensions = array<i32: 1>} : vector<1x8xi32>
      %47 = vector.broadcast %15 : i32 to vector<1x8xi32>
      %48 = arith.addi %47, %46 : vector<1x8xi32>
      %c0_24 = arith.constant 0 : index
      %c0_25 = arith.constant 0 : index
      %49 = vector.load %arg6[%c0_24, %c0_25] : memref<8x1xf32, #tpu.memory_space<vmem>>, vector<8x1xf32>
      %50 = vector.broadcast %45 : vector<8x1xi32> to vector<8x8xi32>
      %51 = vector.broadcast %48 : vector<1x8xi32> to vector<8x8xi32>
      %52 = arith.cmpi eq, %50, %51 : vector<8x8xi32>
      %cst_26 = arith.constant 0.000000e+00 : f32
      %53 = vector.broadcast %cst_26 : f32 to vector<8x8xf32>
      %54 = arith.select %52, %8, %53 : vector<8x8xi1>, vector<8x8xf32>
      %cst_27 = arith.constant dense<0.000000e+00> : vector<8xf32>
      %55 = vector.multi_reduction <add>, %54, %cst_27 [1] : vector<8x8xf32> to vector<8xf32>
      %56 = vector.shape_cast %55 : vector<8xf32> to vector<8x1xf32>
      %57 = arith.subf %49, %56 : vector<8x1xf32>
      %c0_28 = arith.constant 0 : index
      %c0_29 = arith.constant 0 : index
      %58 = vector.load %arg6[%c0_28, %c0_29] : memref<8x1xf32, #tpu.memory_space<vmem>>, vector<8x1xf32>
      tpu.vector_store %arg6[%c0_28, %c0_29], %57 {strides = array<i32>} : memref<8x1xf32, #tpu.memory_space<vmem>>, vector<8x1xf32>,
    } else {
    }
    %c8_i32_14 = arith.constant 8 : i32
    %23 = arith.addi %14, %c8_i32_14 : i32
    %c8_i32_15 = arith.constant 8 : i32
    %24 = arith.addi %23, %c8_i32_15 : i32
    %25 = arith.cmpi slt, %15, %24 : i32
    %c8_i32_16 = arith.constant 8 : i32
    %26 = arith.addi %14, %c8_i32_16 : i32
    %c8_i32_17 = arith.constant 8 : i32
    %27 = arith.addi %15, %c8_i32_17 : i32
    %28 = arith.cmpi slt, %26, %27 : i32
    %29 = arith.andi %25, %28 : i1
    %c8_i32_18 = arith.constant 8 : i32
    %30 = arith.subi %14, %c8_i32_18 : i32
    %c8_i32_19 = arith.constant 8 : i32
    %31 = arith.addi %30, %c8_i32_19 : i32
    %32 = arith.cmpi slt, %15, %31 : i32
    %c8_i32_20 = arith.constant 8 : i32
    %33 = arith.subi %14, %c8_i32_20 : i32
    %c8_i32_21 = arith.constant 8 : i32
    %34 = arith.addi %15, %c8_i32_21 : i32
    %35 = arith.cmpi slt, %33, %34 : i32
    %36 = arith.andi %32, %35 : i1
    %37 = arith.ori %29, %36 : i1
    %38 = arith.extui %37 : i1 to i32
    %c0_i32_22 = arith.constant 0 : i32
    %39 = arith.cmpi ne, %38, %c0_i32_22 : i32
    scf.if %39 {
      %43 = tpu.iota {dimensions = array<i32: 0>} : vector<8x1xi32>
      %44 = vector.broadcast %14 : i32 to vector<8x1xi32>
      %45 = arith.addi %44, %43 : vector<8x1xi32>
      %46 = tpu.iota {dimensions = array<i32: 1>} : vector<1x8xi32>
      %47 = vector.broadcast %15 : i32 to vector<1x8xi32>
      %48 = arith.addi %47, %46 : vector<1x8xi32>
      %c8_i32_24 = arith.constant 8 : i32
      %49 = vector.broadcast %c8_i32_24 : i32 to vector<8x1xi32>
      %50 = arith.addi %45, %49 : vector<8x1xi32>
      %51 = vector.broadcast %48 : vector<1x8xi32> to vector<8x8xi32>
      %52 = vector.broadcast %50 : vector<8x1xi32> to vector<8x8xi32>
      %53 = arith.cmpi eq, %51, %52 : vector<8x8xi32>
      %c8_i32_25 = arith.constant 8 : i32
      %54 = vector.broadcast %c8_i32_25 : i32 to vector<8x1xi32>
      %55 = arith.subi %45, %54 : vector<8x1xi32>
      %56 = vector.broadcast %48 : vector<1x8xi32> to vector<8x8xi32>
      %57 = vector.broadcast %55 : vector<8x1xi32> to vector<8x8xi32>
      %58 = arith.cmpi eq, %56, %57 : vector<8x8xi32>
      %59 = arith.ori %53, %58 : vector<8x8xi1>
      %c0_26 = arith.constant 0 : index
      %c0_27 = arith.constant 0 : index
      %60 = vector.load %arg7[%c0_26, %c0_27] : memref<8x1xf32, #tpu.memory_space<vmem>>, vector<8x1xf32>
      %cst_28 = arith.constant 0.000000e+00 : f32
      %61 = vector.broadcast %cst_28 : f32 to vector<8x8xf32>
      %62 = arith.select %59, %5, %61 : vector<8x8xi1>, vector<8x8xf32>
      %cst_29 = arith.constant dense<0.000000e+00> : vector<8xf32>
      %63 = vector.multi_reduction <add>, %62, %cst_29 [1] : vector<8x8xf32> to vector<8xf32>
      %64 = vector.shape_cast %63 : vector<8xf32> to vector<8x1xf32>
      %65 = arith.addf %60, %64 : vector<8x1xf32>
      %c0_30 = arith.constant 0 : index
      %c0_31 = arith.constant 0 : index
      %66 = vector.load %arg7[%c0_30, %c0_31] : memref<8x1xf32, #tpu.memory_space<vmem>>, vector<8x1xf32>
      tpu.vector_store %arg7[%c0_30, %c0_31], %65 {strides = array<i32>} : memref<8x1xf32, #tpu.memory_space<vmem>>, vector<8x1xf32>,
    } else {
    }
    %c1_i32 = arith.constant 1 : i32
    %40 = arith.cmpi eq, %arg1, %c1_i32 : i32
    %41 = arith.extui %40 : i1 to i32
    %c0_i32_23 = arith.constant 0 : i32
    %42 = arith.cmpi ne, %41, %c0_i32_23 : i32
    scf.if %42 {
      %c0_24 = arith.constant 0 : index
      %c0_25 = arith.constant 0 : index
      %43 = vector.load %arg6[%c0_24, %c0_25] : memref<8x1xf32, #tpu.memory_space<vmem>>, vector<8x1xf32>
      %44 = math.log %43 : vector<8x1xf32>
      %cst_26 = arith.constant 2.000000e+00 : f32
      %45 = vector.broadcast %cst_26 : f32 to vector<8x1xf32>
      %46 = arith.addf %45, %44 : vector<8x1xf32>
      %c0_27 = arith.constant 0 : index
      %c0_28 = arith.constant 0 : index
      %47 = vector.load %arg7[%c0_27, %c0_28] : memref<8x1xf32, #tpu.memory_space<vmem>>, vector<8x1xf32>
      %48 = arith.subf %46, %47 : vector<8x1xf32>
      %c0_29 = arith.constant 0 : index
      %c0_30 = arith.constant 0 : index
      %49 = vector.load %arg4[%c0_29, %c0_30] : memref<8x1xf32, #tpu.memory_space<vmem>>, vector<8x1xf32>
      tpu.vector_store %arg4[%c0_29, %c0_30], %48 {strides = array<i32>} : memref<8x1xf32, #tpu.memory_space<vmem>>, vector<8x1xf32>,
    } else {
    }
    return
  }
  func.func @transform_0(%arg0: i32, %arg1: i32) -> (i32, i32) {
    %c0_i32 = arith.constant 0 : i32
    %c0_i32_0 = arith.constant 0 : i32
    return %arg0, %c0_i32 : i32, i32
  }
  func.func @transform_1(%arg0: i32, %arg1: i32) -> (i32, i32) {
    %c0_i32 = arith.constant 0 : i32
    %c0_i32_0 = arith.constant 0 : i32
    return %arg1, %c0_i32 : i32, i32
  }
  func.func @transform_2(%arg0: i32, %arg1: i32) -> (i32, i32) {
    %c0_i32 = arith.constant 0 : i32
    %c0_i32_0 = arith.constant 0 : i32
    return %arg0, %c0_i32 : i32, i32
  }
}

</mosaic_0001>

<llo_original>
// kernel: tpu_custom_call.1
$region0: #{tpu_custom_call.1}
  #allocation0 [shape = 'u32[]', space=smem, size = 0x4, offset = 0x4, fixed_abs, tag = 'smem constant byte address 0x4 - core index']
  #allocation1 [shape = 'u32[144,128]{1,0:T(1,128)}', space=vmem, size = 0x12000, scoped, tag = 'internal scratch']
  #allocation2 [shape = 'f32[8,128]{1,0:T(8,128)}', space=vmem, size = 0x1000, scoped, tag = 'scratch operand']
  #allocation3 [shape = 'f32[8,1]{1,0:T(8,128)}', space=vmem, size = 0x1000, scoped, tag = 'scratch operand']
  #allocation4 [shape = 'f32[8,1]{1,0:T(8,128)}', space=vmem, size = 0x1000, scoped, tag = 'scratch operand']
  %s0 = inlined_call_operand.hbm [shape: f32[16,128], index: 0, kind: input, shape index: {}]
  %s1 = inlined_call_operand.hbm [shape: f32[16,128], index: 1, kind: input, shape index: {}]
  %s2 = inlined_call_operand.vmem [shape: f32[16,1], index: 2, kind: output, shape index: {}]
  %s3 = sld [smem:[#allocation0]]
  $region65: #{tpu_custom_call.1} parent=0
    _
  %s5 = ssub.s32 1, %s3
  %s6 = scalar_select 0, %s5, %s3
  $region1: #{tpu_custom_call.1} parent=0
    #allocation5 [shape = 'u8[8192]{0}', space=vmem, size = 0x2000, scoped, tag = 'input window, operand 0']
    #allocation6 [shape = 's32[2]{0}', space=sflag, size = 0x8, scoped, tag = 'scoped memory for tpu_custom_call.1']
    #allocation7 [shape = 'u8[8192]{0}', space=vmem, size = 0x2000, scoped, tag = 'input window, operand 1']
    #allocation8 [shape = 's32[2]{0}', space=sflag, size = 0x8, scoped, tag = 'scoped memory for tpu_custom_call.1']
    %7 = vsyncpa [#allocation6], 0
    %s8 = scalar_lea.sflag [#allocation6], 1
    %9 = vsyncpa %s8, 0
    %10 = vsyncpa [#allocation8], 0
    %s11 = scalar_lea.sflag [#allocation8], 1
    %12 = vsyncpa %s11, 0
    loop: start=0, step=1, limit=6
    $region2: #{tpu_custom_call.1} parent=1 // loop_pre_header
      _
    $region3: #{tpu_custom_call.1} parent=1 // loop_header
      %s14 = sphi 0, %s18
      %p15 = scmp.ge.s32.totalorder %s14, 6
      %s21 = sphi 0, %s33
      %s22 = sphi 0, %s29
      %s23 = sphi 0, %s21
      %s24 = sphi 0, %s22
      %s25 = sphi 0, %s23
      %s26 = sphi 0, %s24
      %s36 = sphi 0, %s38
      %s39 = sphi 0, %s36
      %s40 = sphi 0, %s39
      %s56 = sphi 0, %s40
      %s62 = sphi 0, %s64
      %s65 = sphi 0, %s62
      %s66 = sphi 0, %s65
      %s82 = sphi 0, %s66
      %s88 = sphi 0, %s90
      %s91 = sphi 0, %s88
      %s92 = sphi 0, %s91
      %s108 = sphi 0, %s92
    $region4: #{tpu_custom_call.1} parent=1 // loop_header_branch
      %17 = sbr.rel (%p15) target = $region8
    $region5: #{tpu_custom_call.1} parent=1 // loop_body
      %s19 = ssub.s32 %s14, 1
      %s20 = ssub.s32 %s14, 2
      %s27 = sadd.s32 1, %s22
      %p28 = scmp.ge.s32.totalorder %s27, 2
      %s29 = scalar_select %p28, 0, %s27
      %s30 = sadd.s32 1, %s21
      %s31 = scalar_select %p28, %s30, %s21
      %p32 = scmp.ge.s32.totalorder %s31, 2
      %s33 = scalar_select %p32, 0, %s31
      %s34 = ssub.s32 %s21, %s33
      %p35 = scmp.eq.s32.totalorder %s34, 0
      %s37 = sadd.s32 %s36, 1
      %s38 = scalar_select %p35, %s36, %s37
      %p41 = pneg %p35
      %p42 = scmp.eq.s32.totalorder %s14, 3
      %p43 = por %p41, %p42
      %p44 = scmp.ne.s32.totalorder %s36, %s39
      %p45 = scmp.eq.s32.totalorder %s14, 0
      %p46 = por %p44, %p45
      %p47 = scmp.ne.s32.totalorder %s36, %s39
      %p48 = scmp.eq.s32.totalorder %s19, 3
      %p49 = por %p47, %p48
      %p50 = scmp.ne.s32.totalorder %s39, %s40
      %p51 = scmp.eq.s32.totalorder %s19, 0
      %p52 = por %p50, %p51
      %p53 = scmp.ne.s32.totalorder %s39, %s40
      %p54 = scmp.eq.s32.totalorder %s20, 3
      %p55 = por %p53, %p54
      %p57 = scmp.ne.s32.totalorder %s40, %s56
      %p58 = scmp.eq.s32.totalorder %s20, 0
      %p59 = por %p57, %p58
      %s60 = ssub.s32 %s22, %s29
      %p61 = scmp.eq.s32.totalorder %s60, 0
      %s63 = sadd.s32 %s62, 1
      %s64 = scalar_select %p61, %s62, %s63
      %p67 = pneg %p61
      %p68 = scmp.eq.s32.totalorder %s14, 3
      %p69 = por %p67, %p68
      %p70 = scmp.ne.s32.totalorder %s62, %s65
      %p71 = scmp.eq.s32.totalorder %s14, 0
      %p72 = por %p70, %p71
      %p73 = scmp.ne.s32.totalorder %s62, %s65
      %p74 = scmp.eq.s32.totalorder %s19, 3
      %p75 = por %p73, %p74
      %p76 = scmp.ne.s32.totalorder %s65, %s66
      %p77 = scmp.eq.s32.totalorder %s19, 0
      %p78 = por %p76, %p77
      %p79 = scmp.ne.s32.totalorder %s65, %s66
      %p80 = scmp.eq.s32.totalorder %s20, 3
      %p81 = por %p79, %p80
      %p83 = scmp.ne.s32.totalorder %s66, %s82
      %p84 = scmp.eq.s32.totalorder %s20, 0
      %p85 = por %p83, %p84
      %s86 = ssub.s32 %s21, %s33
      %p87 = scmp.eq.s32.totalorder %s86, 0
      %s89 = sadd.s32 %s88, 1
      %s90 = scalar_select %p87, %s88, %s89
      %p93 = pneg %p87
      %p94 = scmp.eq.s32.totalorder %s14, 3
      %p95 = por %p93, %p94
      %p96 = scmp.ne.s32.totalorder %s88, %s91
      %p97 = scmp.eq.s32.totalorder %s14, 0
      %p98 = por %p96, %p97
      %p99 = scmp.ne.s32.totalorder %s88, %s91
      %p100 = scmp.eq.s32.totalorder %s19, 3
      %p101 = por %p99, %p100
      %p102 = scmp.ne.s32.totalorder %s91, %s92
      %p103 = scmp.eq.s32.totalorder %s19, 0
      %p104 = por %p102, %p103
      %p105 = scmp.ne.s32.totalorder %s91, %s92
      %p106 = scmp.eq.s32.totalorder %s20, 3
      %p107 = por %p105, %p106
      %p109 = scmp.ne.s32.totalorder %s92, %s108
      %p110 = scmp.eq.s32.totalorder %s20, 0
      %p111 = por %p109, %p110
      %p112 = scmp.le.s32.totalorder 1, %s14
      %p113 = scmp.lt.s32.totalorder %s14, 5
      %p114 = pnand %p112, %p113
      %p115 = pneg %p114
      // Predicated region
      $region9: #{tpu_custom_call.1} parent=5 // pred_check
        _
      $region10: #{tpu_custom_call.1} parent=5 // pred_check_branch
        %117 = sbr.rel (%p114) target = $region12
      $region11: #{tpu_custom_call.1} parent=5 // pred_region
        %s118 = ssub.s32 %s14, 1
      $region12: #{tpu_custom_call.1} parent=5 // pred_fallthru
        _
      %p119 = scmp.lt.s32.totalorder %s14, 4
      // Predicated region
      $region13: #{tpu_custom_call.1} parent=5 // pred_check
        %p120 = pneg %p119
      $region14: #{tpu_custom_call.1} parent=5 // pred_check_branch
        %122 = sbr.rel (%p120) target = $region16
      $region15: #{tpu_custom_call.1} parent=5 // pred_region
        // Predicated region
        $region17: #{tpu_custom_call.1} parent=15 // pred_check
          %p123 = pneg %p46
        $region18: #{tpu_custom_call.1} parent=15 // pred_check_branch
          %125 = sbr.rel (%p123) target = $region20
        $region19: #{tpu_custom_call.1} parent=15 // pred_region
          %s126 = sand.u32 %s36, 1
          %s127 = scalar_lea.sflag [#allocation6], %s126
          %s128 = sand.u32 %s36, 1
          %s129 = smul.addr %s128, 8
          %s130 = scalar_lea.vmem [#allocation5], %s129
          %s132 = ssub.s32 128, 128
          %133 = vsyncadd %s127, %s132
          %s134 = smul.addr %s21, 128
          %s135 = scalar_lea.hbm %s0, %s134
          %s137 = sshll.u32 %s130, 4
          %s138 = int_to_ptr.vmem [resolvable:$true] %s137
          %140 = dma.hbm_to_vmem [thread:$0]  %s135, 128, %s138, %s127
        $region20: #{tpu_custom_call.1} parent=15 // pred_fallthru
          _
        // Predicated region
        $region21: #{tpu_custom_call.1} parent=15 // pred_check
          %p141 = pneg %p72
        $region22: #{tpu_custom_call.1} parent=15 // pred_check_branch
          %143 = sbr.rel (%p141) target = $region24
        $region23: #{tpu_custom_call.1} parent=15 // pred_region
          %s144 = sand.u32 %s62, 1
          %s145 = scalar_lea.sflag [#allocation8], %s144
          %s146 = sand.u32 %s62, 1
          %s147 = smul.addr %s146, 8
          %s148 = scalar_lea.vmem [#allocation7], %s147
          %s150 = ssub.s32 128, 128
          %151 = vsyncadd %s145, %s150
          %s152 = smul.addr %s22, 128
          %s153 = scalar_lea.hbm %s1, %s152
          %s155 = sshll.u32 %s148, 4
          %s156 = int_to_ptr.vmem [resolvable:$true] %s155
          %158 = dma.hbm_to_vmem [thread:$0]  %s153, 128, %s156, %s145
        $region24: #{tpu_custom_call.1} parent=15 // pred_fallthru
          _
      $region16: #{tpu_custom_call.1} parent=5 // pred_fallthru
        _
      %p159 = scmp.le.s32.totalorder 1, %s14
      %p160 = scmp.lt.s32.totalorder %s14, 5
      %p161 = pnand %p159, %p160
      %p162 = pneg %p161
      // Predicated region
      $region25: #{tpu_custom_call.1} parent=5 // pred_check
        _
      $region26: #{tpu_custom_call.1} parent=5 // pred_check_branch
        %164 = sbr.rel (%p161) target = $region28
      $region27: #{tpu_custom_call.1} parent=5 // pred_region
        %s165 = ssub.s32 %s14, 1
        %s166 = sand.u32 %s39, 1
        %s167 = scalar_lea.sflag [#allocation6], %s166
        %s168 = sand.u32 %s39, 1
        %s169 = smul.addr %s168, 8
        %s170 = scalar_lea.vmem [#allocation5], %s169
        // Predicated region
        $region29: #{tpu_custom_call.1} parent=27 // pred_check
          %p171 = pneg %p52
        $region30: #{tpu_custom_call.1} parent=27 // pred_check_branch
          %173 = sbr.rel (%p171) target = $region32
        $region31: #{tpu_custom_call.1} parent=27 // pred_region
          %174 = dma.done %s167, 128
        $region32: #{tpu_custom_call.1} parent=27 // pred_fallthru
          _
        %s175 = sand.u32 %s65, 1
        %s176 = scalar_lea.sflag [#allocation8], %s175
        %s177 = sand.u32 %s65, 1
        %s178 = smul.addr %s177, 8
        %s179 = scalar_lea.vmem [#allocation7], %s178
        // Predicated region
        $region33: #{tpu_custom_call.1} parent=27 // pred_check
          %p180 = pneg %p78
        $region34: #{tpu_custom_call.1} parent=27 // pred_check_branch
          %182 = sbr.rel (%p180) target = $region36
        $region35: #{tpu_custom_call.1} parent=27 // pred_region
          %183 = dma.done %s176, 128
        $region36: #{tpu_custom_call.1} parent=27 // pred_fallthru
          _
        %s184 = sand.u32 %s39, 1
        %s185 = scalar_lea.sflag [#allocation6], %s184
        %s186 = sand.u32 %s39, 1
        %s187 = smul.addr %s186, 8
        %s188 = scalar_lea.vmem [#allocation5], %s187
        %p189 = pneg %p52
        %p190 = pneg %p49
        %s191 = sand.u32 %s65, 1
        %s192 = scalar_lea.sflag [#allocation8], %s191
        %s193 = sand.u32 %s65, 1
        %s194 = smul.addr %s193, 8
        %s195 = scalar_lea.vmem [#allocation7], %s194
        %p196 = pneg %p78
        %p197 = pneg %p75
        %p198 = pneg %p104
        %p199 = pneg %p101
        %p200 = scmp.lt.s32.totalorder %s23, 1
        %s201 = scalar_select %p200, %s23, 1
        %s202 = smul.addr %s201, 8
        %s203 = scalar_lea.vmem %s2, %s202
        %p204 = scmp.lt.s32.totalorder %s23, 1
        %s205 = scalar_select %p204, %s23, 1
        %s206 = smul.addr %s205, 8
        %s207 = scalar_lea.vmem %s2, %s206
        %p208 = scmp.eq.s32.totalorder %s24, 0
        // Predicated region
        $region37: #{tpu_custom_call.1} parent=27 // pred_check
          %p209 = pneg %p208
        $region38: #{tpu_custom_call.1} parent=27 // pred_check_branch
          %211 = sbr.rel (%p209) target = $region40
        $region39: #{tpu_custom_call.1} parent=27 // pred_region
          %v212 = vld [vmem:[%s170] sm:$0xff]
          %v213 = vmul.f32 %v212, 2.0
          %214 = vst [vmem:[#allocation2] sm:$0xff] %v213
          %vm215 = vcmask 7168
          %216 = vst.msk [vmem:[#allocation3] sm:$0xff] %vm215, 0.0
          %217 = vst.msk [vmem:[#allocation4] sm:$0xff] %vm215, 0.0
        $region40: #{tpu_custom_call.1} parent=27 // pred_fallthru
          _
        %v218 = vld [vmem:[#allocation2] sm:$0xff]
        %v219 = vld [vmem:[%s179] sm:$0xff]
        %220 = vmatprep.subr.mxu0 0.0
        %221 = vmatpush1.xpose.msra.mxu0 %v219
        %222 = vmatprep.subr.mxu0 0.0
        %223 = vmatpush1.xpose.msra.mxu0 0.0
        %224 = vmatprep.subr.mxu0 0.0
        %225 = vmatpush1.xpose.msra.mxu0 0.0
        %226 = vmatprep.subr.mxu0 0.0
        %227 = vmatpush1.xpose.msra.mxu0 0.0
        %228 = vmatprep.subr.mxu0 0.0
        %229 = vmatpush1.xpose.msra.mxu0 0.0
        %230 = vmatprep.subr.mxu0 0.0
        %231 = vmatpush1.xpose.msra.mxu0 0.0
        %232 = vmatprep.subr.mxu0 0.0
        %233 = vmatpush1.xpose.msra.mxu0 0.0
        %234 = vmatprep.subr.mxu0 0.0
        %235 = vmatpush1.xpose.msra.mxu0 0.0
        %236 = vmatprep.subr.mxu0 0.0
        %237 = vmatpush1.xpose.msra.mxu0 0.0
        %238 = vmatprep.subr.mxu0 0.0
        %239 = vmatpush1.xpose.msra.mxu0 0.0
        %240 = vmatprep.subr.mxu0 0.0
        %241 = vmatpush1.xpose.msra.mxu0 0.0
        %242 = vmatprep.subr.mxu0 0.0
        %243 = vmatpush1.xpose.msra.mxu0 0.0
        %244 = vmatprep.subr.mxu0 0.0
        %245 = vmatpush1.xpose.msra.mxu0 0.0
        %246 = vmatprep.subr.mxu0 0.0
        %247 = vmatpush1.xpose.msra.mxu0 0.0
        %248 = vmatprep.subr.mxu0 0.0
        %249 = vmatpush1.xpose.msra.mxu0 0.0
        %250 = vmatprep.subr.mxu0 0.0
        %251 = vmatpush1.xpose.msra.mxu0 0.0
        %252 = vmatprep.subr.mxu0 0.0
        %253 = vmatpush1.xpose.msra.mxu0 0.0
        %254 = vmatprep.subr.mxu0 0.0
        %255 = vmatpush1.xpose.msra.mxu0 0.0
        %256 = vmatprep.subr.mxu0 0.0
        %257 = vmatpush1.xpose.msra.mxu0 0.0
        %258 = vmatprep.subr.mxu0 0.0
        %259 = vmatpush1.xpose.msra.mxu0 0.0
        %260 = vmatprep.subr.mxu0 0.0
        %261 = vmatpush1.xpose.msra.mxu0 0.0
        %262 = vmatprep.subr.mxu0 0.0
        %263 = vmatpush1.xpose.msra.mxu0 0.0
        %264 = vmatprep.subr.mxu0 0.0
        %265 = vmatpush1.xpose.msra.mxu0 0.0
        %266 = vmatprep.subr.mxu0 0.0
        %267 = vmatpush1.xpose.msra.mxu0 0.0
        %268 = vmatprep.subr.mxu0 0.0
        %269 = vmatpush1.xpose.msra.mxu0 0.0
        %270 = vmatprep.subr.mxu0 0.0
        %271 = vmatpush1.xpose.msra.mxu0 0.0
        %272 = vmatprep.subr.mxu0 0.0
        %273 = vmatpush1.xpose.msra.mxu0 0.0
        %274 = vmatprep.subr.mxu0 0.0
        %275 = vmatpush1.xpose.msra.mxu0 0.0
        %276 = vmatprep.subr.mxu0 0.0
        %277 = vmatpush1.xpose.msra.mxu0 0.0
        %278 = vmatprep.subr.mxu0 0.0
        %279 = vmatpush1.xpose.msra.mxu0 0.0
        %280 = vmatprep.subr.mxu0 0.0
        %281 = vmatpush1.xpose.msra.mxu0 0.0
        %282 = vmatprep.subr.mxu0 0.0
        %283 = vmatpush1.xpose.msra.mxu0 0.0
        %284 = vmatprep.mubr.f32.mxu0 0.0
        %285 = vmatmul.mubr.f32.gmra.mrb[0].mxu0 %v218
        %v286 = vpop.f32.mrb[0].mxu0
        %v287 = vadd.f32 0.0, %v286
        %v288 = vpop.f32.mrb[0].mxu0
        %289 = vdwg.mxu0
        %v290 = vsub.f32 %v287, 2.0
        %v291 = vmul.f32 %v290, 1.442695
        %v292 = vpow.pop %v291
        %v293 = vld [vmem:[#allocation3] sm:$0xff]
        %vm294 = vcmask 64512
        %v295 = vsel %vm294, %v292, 0.0
        %296 = vadd.xlane.f32.xlu0 %v295
        %v297 = vpop.xlane.xlu0 %296
        %v298 = vadd.f32 %v293, %v297
        %vm299 = vcmask 7168
        %300 = vst.msk [vmem:[#allocation3] sm:$0xff] %vm299, %v298
        %s301 = smul.u32 %s23, 8
        %s302 = smul.u32 %s24, 8
        %s303 = sadd.s32 %s301, 8
        %p304 = scmp.lt.s32.totalorder %s302, %s303
        %s305 = sadd.s32 %s302, 8
        %p306 = scmp.lt.s32.totalorder %s301, %s305
        %p307 = pnand %p304, %p306
        %p308 = pneg %p307
        // Predicated region
        $region41: #{tpu_custom_call.1} parent=27 // pred_check
          _
        $region42: #{tpu_custom_call.1} parent=27 // pred_check_branch
          %310 = sbr.rel (%p307) target = $region44
        $region43: #{tpu_custom_call.1} parent=27 // pred_region
          %v311 = vlaneseq
          %v312 = vshrl.u32 %v311, 7
          %v313 = vstv %s301
          %v314 = vadd.s32 %v313, %v312
          %v315 = vlaneseq
          %v316 = vand.u32 %v315, 127
          %v317 = vstv %s302
          %v318 = vadd.s32 %v317, %v316
          %v319 = vld [vmem:[#allocation3] sm:$0xff]
          %vm320 = vcmp.eq.s32.totalorder %v314, %v318
          %v321 = vsel %vm320, %v292, 0.0
          %v322 = vsel %vm294, %v321, 0.0
          %323 = vadd.xlane.f32.xlu0 %v322
          %v324 = vpop.xlane.xlu0 %323
          %v325 = vsub.f32 %v319, %v324
          %326 = vst.msk [vmem:[#allocation3] sm:$0xff] %vm299, %v325
        $region44: #{tpu_custom_call.1} parent=27 // pred_fallthru
          _
        %s327 = sadd.s32 %s301, 16
        %p328 = scmp.lt.s32.totalorder %s302, %s327
        %p329 = scmp.lt.s32.totalorder %s303, %s305
        %p330 = pnand %p328, %p329
        %p331 = pneg %p330
        %p332 = scmp.lt.s32.totalorder %s302, %s301
        %s333 = ssub.s32 %s301, 8
        %p334 = scmp.lt.s32.totalorder %s333, %s305
        %p335 = pnand %p332, %p334
        %p336 = pneg %p335
        %p337 = por %p331, %p336
        // Predicated region
        $region45: #{tpu_custom_call.1} parent=27 // pred_check
          %p338 = pneg %p337
        $region46: #{tpu_custom_call.1} parent=27 // pred_check_branch
          %340 = sbr.rel (%p338) target = $region48
        $region47: #{tpu_custom_call.1} parent=27 // pred_region
          %v341 = vlaneseq
          %v342 = vshrl.u32 %v341, 7
          %v343 = vstv %s301
          %v344 = vadd.s32 %v343, %v342
          %v345 = vlaneseq
          %v346 = vand.u32 %v345, 127
          %v347 = vstv %s302
          %v348 = vadd.s32 %v347, %v346
          %v349 = vadd.s32 %v344, 8
          %vm350 = vcmp.eq.s32.totalorder %v348, %v349
          %v351 = vsub.s32 %v344, 8
          %vm352 = vcmp.eq.s32.totalorder %v348, %v351
          %vm353 = vmor %vm350, %vm352
          %v354 = vld [vmem:[#allocation4] sm:$0xff]
          %v355 = vsel %vm353, %v287, 0.0
          %v356 = vsel %vm294, %v355, 0.0
          %357 = vadd.xlane.f32.xlu0 %v356
          %v358 = vpop.xlane.xlu0 %357
          %v359 = vadd.f32 %v354, %v358
          %360 = vst.msk [vmem:[#allocation4] sm:$0xff] %vm299, %v359
        $region48: #{tpu_custom_call.1} parent=27 // pred_fallthru
          _
        %p361 = scmp.eq.s32.totalorder %s24, 1
        // Predicated region
        $region49: #{tpu_custom_call.1} parent=27 // pred_check
          %p362 = pneg %p361
        $region50: #{tpu_custom_call.1} parent=27 // pred_check_branch
          %364 = sbr.rel (%p362) target = $region52
        $region51: #{tpu_custom_call.1} parent=27 // pred_region
          %v365 = vld [vmem:[#allocation3] sm:$0xff]
          %v366 = vlog2.pop %v365
          %v367 = vmul.f32 %v366, 0.6931472
          %v368 = vadd.f32 %v367, 2.0
          %v369 = vld [vmem:[#allocation4] sm:$0xff]
          %v370 = vsub.f32 %v368, %v369
          %371 = vst.msk [vmem:[%s207] sm:$0xff] %vm299, %v370
        $region52: #{tpu_custom_call.1} parent=27 // pred_fallthru
          _
        %p372 = scmp.lt.s32.totalorder %s23, 1
        %s373 = scalar_select %p372, %s23, 1
        %s374 = smul.addr %s373, 8
        %s375 = scalar_lea.vmem %s2, %s374
        // Predicated region
        $region53: #{tpu_custom_call.1} parent=27 // pred_check
          %p376 = pneg %p101
        $region54: #{tpu_custom_call.1} parent=27 // pred_check_branch
          %378 = sbr.rel (%p376) target = $region56
        $region55: #{tpu_custom_call.1} parent=27 // pred_region
          _
        $region56: #{tpu_custom_call.1} parent=27 // pred_fallthru
          _
      $region28: #{tpu_custom_call.1} parent=5 // pred_fallthru
        _
      %p379 = scmp.le.s32.totalorder 2, %s14
      // Predicated region
      $region57: #{tpu_custom_call.1} parent=5 // pred_check
        %p380 = pneg %p379
      $region58: #{tpu_custom_call.1} parent=5 // pred_check_branch
        %382 = sbr.rel (%p380) target = $region60
      $region59: #{tpu_custom_call.1} parent=5 // pred_region
        %s383 = ssub.s32 %s14, 2
        // Predicated region
        $region61: #{tpu_custom_call.1} parent=59 // pred_check
          %p384 = pneg %p107
        $region62: #{tpu_custom_call.1} parent=59 // pred_check_branch
          %386 = sbr.rel (%p384) target = $region64
        $region63: #{tpu_custom_call.1} parent=59 // pred_region
          %p387 = scmp.lt.s32.totalorder %s25, 1
          %s388 = scalar_select %p387, %s25, 1
          %s389 = smul.addr %s388, 8
          %s390 = scalar_lea.vmem %s2, %s389
        $region64: #{tpu_custom_call.1} parent=59 // pred_fallthru
          _
      $region60: #{tpu_custom_call.1} parent=5 // pred_fallthru
        _
    $region6: #{tpu_custom_call.1} parent=1 // loop_footer
      %s18 = sadd.s32 1, %s14
    $region7: #{tpu_custom_call.1} parent=1 // loop_footer_branch
      %13 = sbr.rel target = $region3
    $region8: #{tpu_custom_call.1} parent=1 // loop_exit
      _
    %391 = vsyncpa [#allocation6], 1
    %s392 = scalar_lea.sflag [#allocation6], 1
    %393 = vsyncpa %s392, 1
    %394 = vsyncpa [#allocation8], 1
    %s395 = scalar_lea.sflag [#allocation8], 1
    %396 = vsyncpa %s395, 1

</llo_original>
